<compile_context>
chip_gen: v5e
topology: v5e:2x2
jax: 0.10.0
libtpu: 0.0.40
codegen_flags: <defaults>
</compile_context>

<pallas_src>
import jax
import jax.numpy as jnp
from jax.experimental import pallas as pl
from jax.experimental.pallas import tpu as pltpu

LANES = 128  # TPU vreg lane width


def _mlp_kernel(w1_ref, b1_ref, w2_ref, b2_ref, x_ref, o_ref):
    # x_ref : (tile_rows, 128) f32 VMEM tile, batch on lanes (lane-dense).
    # w1/b1/w2 : (H,) f32 in SMEM ; b2 : (1,) f32 in SMEM.
    x = x_ref[...]
    acc = jnp.zeros(x.shape, jnp.float32)
    num_hidden = w1_ref.shape[0]
    # H is tiny and static -> fully unrolled broadcast-FMA + relu + accumulate
    # on the VPU; the MXU is never touched.
    for h in range(num_hidden):
        hidden = jnp.maximum(x * w1_ref[h] + b1_ref[h], 0.0)
        acc = acc + hidden * w2_ref[h]
    o_ref[...] = (acc + b2_ref[0]).astype(o_ref.dtype)


def _round_up(a, b):
    return ((a + b - 1) // b) * b


def red_neuronal_forward(x, w1, b1, w2, b2, *, block_rows=2048):
    """x: (N, 1) float32 -> (N, 1) float32.

    w1: (1, H), b1: (1, H), w2: (H, 1), b2: (1, 1)  (transposed nn.Linear
    weights, so the math is x @ w1 + b1 -> relu -> @ w2 + b2).
    """
    n = int(x.shape[0])
    h = int(w1.size)

    # ---- lane-dense batch layout: (N, 1) -> (rows_pad, 128) --------------
    rows = max(pl.cdiv(n, LANES), 1)
    tile_rows = min(block_rows, _round_up(rows, 8))     # (8,128)-aligned tile
    rows_pad = _round_up(rows, tile_rows)
    n_pad = rows_pad * LANES

    x_flat = jnp.pad(x.reshape(-1).astype(jnp.float32), (0, n_pad - n))
    x2d = x_flat.reshape(rows_pad, LANES)

    # ---- weights as flat SMEM scalars ------------------------------------
    w1f = w1.reshape(-1).astype(jnp.float32)   # (H,)
    b1f = b1.reshape(-1).astype(jnp.float32)   # (H,)
    w2f = w2.reshape(-1).astype(jnp.float32)   # (H,)
    b2f = b2.reshape(-1).astype(jnp.float32)   # (1,)

    grid = (rows_pad // tile_rows,)
    smem_spec = pl.BlockSpec(memory_space=pltpu.MemorySpace.SMEM)
    vmem_tile = pl.BlockSpec((tile_rows, LANES), lambda i: (i, 0))

    cost = pl.CostEstimate(
        flops=n_pad * (4 * h + 1),
        transcendentals=0,
        bytes_accessed=8 * n_pad + 4 * (3 * h + 1),
    )

    out = pl.pallas_call(
        _mlp_kernel,
        out_shape=jax.ShapeDtypeStruct((rows_pad, LANES), jnp.float32),
        grid=grid,
        in_specs=[smem_spec, smem_spec, smem_spec, smem_spec, vmem_tile],
        out_specs=vmem_tile,
        compiler_params=pltpu.CompilerParams(
            dimension_semantics=("parallel",),
        ),
        cost_estimate=cost,
    )(w1f, b1f, w2f, b2f, x2d)

    # Slice padded rows back off and restore the (N, 1) batch column.
    return out.reshape(-1)[:n].reshape(n, 1)


def init_params(key, hidden_neurons):
    """Deterministic synthetic init mimicking nn.Linear shapes (transposed)."""
    k1, k2, k3, k4 = jax.random.split(key, 4)
    w1 = jax.random.normal(k1, (1, hidden_neurons), jnp.float32) * 0.5
    b1 = jax.random.normal(k2, (1, hidden_neurons), jnp.float32) * 0.1
    w2 = jax.random.normal(k3, (hidden_neurons, 1), jnp.float32) * 0.5
    b2 = jax.random.normal(k4, (1, 1), jnp.float32) * 0.1
    return w1, b1, w2, b2


def reference_forward(x, w1, b1, w2, b2):
    h = jnp.maximum(x @ w1 + b1, 0.0)
    return h @ w2 + b2


if __name__ == "__main__":
    key = jax.random.PRNGKey(0)
    hidden_neurons = 5            # slider default in the module
    kx, kx2, kp = jax.random.split(key, 3)
    w1, b1, w2, b2 = init_params(kp, hidden_neurons)

    # Demo-sized batch (as in the module) ...
    x_small = jax.random.normal(kx, (8, 1), jnp.float32)
    y_small = red_neuronal_forward(x_small, w1, b1, w2, b2)
    jax.block_until_ready(y_small)
    assert y_small.shape == (8, 1)
    assert jnp.allclose(y_small, reference_forward(x_small, w1, b1, w2, b2),
                        atol=1e-5, rtol=1e-5)

    # ... and a non-multiple-of-128 batch to exercise padding + slicing.
    x_med = jax.random.normal(kx2, (300, 1), jnp.float32)
    y_med = red_neuronal_forward(x_med, w1, b1, w2, b2)
    jax.block_until_ready(y_med)
    assert y_med.shape == (300, 1)
    assert jnp.allclose(y_med, reference_forward(x_med, w1, b1, w2, b2),
                        atol=1e-5, rtol=1e-5)

    print("KERNEL_OK")
</pallas_src>

<mosaic_0001>
module attributes {stable_mosaic.version = 11 : i64} {
  func.func @_mlp_kernel(%arg0: i32, %arg1: memref<5xf32, #tpu.memory_space<smem>>, %arg2: memref<5xf32, #tpu.memory_space<smem>>, %arg3: memref<5xf32, #tpu.memory_space<smem>>, %arg4: memref<1xf32, #tpu.memory_space<smem>>, %arg5: memref<8x128xf32, #tpu.memory_space<vmem>>, %arg6: memref<8x128xf32, #tpu.memory_space<vmem>>) attributes {dimension_semantics = [#tpu.dimension_semantics<parallel>], iteration_bounds = array<i64: 1>, scalar_prefetch = 0 : i64, scratch_operands = 0 : i64, tpu.core_type = #tpu.core_type<tc>, window_params = [{transform_indices = @transform_0, window_bounds = array<i64: 5>}, {transform_indices = @transform_1, window_bounds = array<i64: 5>}, {transform_indices = @transform_2, window_bounds = array<i64: 5>}, {transform_indices = @transform_3, window_bounds = array<i64: 1>}, {transform_indices = @transform_4, window_bounds = array<i64: 8, 128>}, {transform_indices = @transform_5, window_bounds = array<i64: 8, 128>}]} {
    %c0 = arith.constant 0 : index
    %c0_0 = arith.constant 0 : index
    %0 = vector.load %arg5[%c0, %c0_0] : memref<8x128xf32, #tpu.memory_space<vmem>>, vector<8x128xf32>
    %cst = arith.constant 0.000000e+00 : f32
    %1 = vector.broadcast %cst : f32 to vector<8x128xf32>
    %c0_1 = arith.constant 0 : index
    %2 = memref.load %arg1[%c0_1] : memref<5xf32, #tpu.memory_space<smem>>
    %3 = vector.broadcast %2 : f32 to vector<8x128xf32>
    %4 = arith.mulf %0, %3 : vector<8x128xf32>
    %c0_2 = arith.constant 0 : index
    %5 = memref.load %arg2[%c0_2] : memref<5xf32, #tpu.memory_space<smem>>
    %6 = vector.broadcast %5 : f32 to vector<8x128xf32>
    %7 = arith.addf %4, %6 : vector<8x128xf32>
    %cst_3 = arith.constant 0.000000e+00 : f32
    %8 = vector.broadcast %cst_3 : f32 to vector<8x128xf32>
    %9 = arith.maximumf %7, %8 : vector<8x128xf32>
    %c0_4 = arith.constant 0 : index
    %10 = memref.load %arg3[%c0_4] : memref<5xf32, #tpu.memory_space<smem>>
    %11 = vector.broadcast %10 : f32 to vector<8x128xf32>
    %12 = arith.mulf %9, %11 : vector<8x128xf32>
    %13 = arith.addf %1, %12 : vector<8x128xf32>
    %c1 = arith.constant 1 : index
    %14 = memref.load %arg1[%c1] : memref<5xf32, #tpu.memory_space<smem>>
    %15 = vector.broadcast %14 : f32 to vector<8x128xf32>
    %16 = arith.mulf %0, %15 : vector<8x128xf32>
    %c1_5 = arith.constant 1 : index
    %17 = memref.load %arg2[%c1_5] : memref<5xf32, #tpu.memory_space<smem>>
    %18 = vector.broadcast %17 : f32 to vector<8x128xf32>
    %19 = arith.addf %16, %18 : vector<8x128xf32>
    %cst_6 = arith.constant 0.000000e+00 : f32
    %20 = vector.broadcast %cst_6 : f32 to vector<8x128xf32>
    %21 = arith.maximumf %19, %20 : vector<8x128xf32>
    %c1_7 = arith.constant 1 : index
    %22 = memref.load %arg3[%c1_7] : memref<5xf32, #tpu.memory_space<smem>>
    %23 = vector.broadcast %22 : f32 to vector<8x128xf32>
    %24 = arith.mulf %21, %23 : vector<8x128xf32>
    %25 = arith.addf %13, %24 : vector<8x128xf32>
    %c2 = arith.constant 2 : index
    %26 = memref.load %arg1[%c2] : memref<5xf32, #tpu.memory_space<smem>>
    %27 = vector.broadcast %26 : f32 to vector<8x128xf32>
    %28 = arith.mulf %0, %27 : vector<8x128xf32>
    %c2_8 = arith.constant 2 : index
    %29 = memref.load %arg2[%c2_8] : memref<5xf32, #tpu.memory_space<smem>>
    %30 = vector.broadcast %29 : f32 to vector<8x128xf32>
    %31 = arith.addf %28, %30 : vector<8x128xf32>
    %cst_9 = arith.constant 0.000000e+00 : f32
    %32 = vector.broadcast %cst_9 : f32 to vector<8x128xf32>
    %33 = arith.maximumf %31, %32 : vector<8x128xf32>
    %c2_10 = arith.constant 2 : index
    %34 = memref.load %arg3[%c2_10] : memref<5xf32, #tpu.memory_space<smem>>
    %35 = vector.broadcast %34 : f32 to vector<8x128xf32>
    %36 = arith.mulf %33, %35 : vector<8x128xf32>
    %37 = arith.addf %25, %36 : vector<8x128xf32>
    %c3 = arith.constant 3 : index
    %38 = memref.load %arg1[%c3] : memref<5xf32, #tpu.memory_space<smem>>
    %39 = vector.broadcast %38 : f32 to vector<8x128xf32>
    %40 = arith.mulf %0, %39 : vector<8x128xf32>
    %c3_11 = arith.constant 3 : index
    %41 = memref.load %arg2[%c3_11] : memref<5xf32, #tpu.memory_space<smem>>
    %42 = vector.broadcast %41 : f32 to vector<8x128xf32>
    %43 = arith.addf %40, %42 : vector<8x128xf32>
    %cst_12 = arith.constant 0.000000e+00 : f32
    %44 = vector.broadcast %cst_12 : f32 to vector<8x128xf32>
    %45 = arith.maximumf %43, %44 : vector<8x128xf32>
    %c3_13 = arith.constant 3 : index
    %46 = memref.load %arg3[%c3_13] : memref<5xf32, #tpu.memory_space<smem>>
    %47 = vector.broadcast %46 : f32 to vector<8x128xf32>
    %48 = arith.mulf %45, %47 : vector<8x128xf32>
    %49 = arith.addf %37, %48 : vector<8x128xf32>
    %c4 = arith.constant 4 : index
    %50 = memref.load %arg1[%c4] : memref<5xf32, #tpu.memory_space<smem>>
    %51 = vector.broadcast %50 : f32 to vector<8x128xf32>
    %52 = arith.mulf %0, %51 : vector<8x128xf32>
    %c4_14 = arith.constant 4 : index
    %53 = memref.load %arg2[%c4_14] : memref<5xf32, #tpu.memory_space<smem>>
    %54 = vector.broadcast %53 : f32 to vector<8x128xf32>
    %55 = arith.addf %52, %54 : vector<8x128xf32>
    %cst_15 = arith.constant 0.000000e+00 : f32
    %56 = vector.broadcast %cst_15 : f32 to vector<8x128xf32>
    %57 = arith.maximumf %55, %56 : vector<8x128xf32>
    %c4_16 = arith.constant 4 : index
    %58 = memref.load %arg3[%c4_16] : memref<5xf32, #tpu.memory_space<smem>>
    %59 = vector.broadcast %58 : f32 to vector<8x128xf32>
    %60 = arith.mulf %57, %59 : vector<8x128xf32>
    %61 = arith.addf %49, %60 : vector<8x128xf32>
    %c0_17 = arith.constant 0 : index
    %62 = memref.load %arg4[%c0_17] : memref<1xf32, #tpu.memory_space<smem>>
    %63 = vector.broadcast %62 : f32 to vector<8x128xf32>
    %64 = arith.addf %61, %63 : vector<8x128xf32>
    %c0_18 = arith.constant 0 : index
    %c0_19 = arith.constant 0 : index
    %65 = vector.load %arg6[%c0_18, %c0_19] : memref<8x128xf32, #tpu.memory_space<vmem>>, vector<8x128xf32>
    tpu.vector_store %arg6[%c0_18, %c0_19], %64 {strides = array<i32>} : memref<8x128xf32, #tpu.memory_space<vmem>>, vector<8x128xf32>,
    return
  }
  func.func @transform_0(%arg0: i32) -> i32 {
    %c0_i32 = arith.constant 0 : i32
    %c0_i32_0 = arith.constant 0 : i32
    return %c0_i32 : i32
  }
  func.func @transform_1(%arg0: i32) -> i32 {
    %c0_i32 = arith.constant 0 : i32
    %c0_i32_0 = arith.constant 0 : i32
    return %c0_i32 : i32
  }
  func.func @transform_2(%arg0: i32) -> i32 {
    %c0_i32 = arith.constant 0 : i32
    %c0_i32_0 = arith.constant 0 : i32
    return %c0_i32 : i32
  }
  func.func @transform_3(%arg0: i32) -> i32 {
    %c0_i32 = arith.constant 0 : i32
    %c0_i32_0 = arith.constant 0 : i32
    return %c0_i32 : i32
  }
  func.func @transform_4(%arg0: i32) -> (i32, i32) {
    %c0_i32 = arith.constant 0 : i32
    %c0_i32_0 = arith.constant 0 : i32
    return %arg0, %c0_i32 : i32, i32
  }
  func.func @transform_5(%arg0: i32) -> (i32, i32) {
    %c0_i32 = arith.constant 0 : i32
    %c0_i32_0 = arith.constant 0 : i32
    return %arg0, %c0_i32 : i32, i32
  }
}

</mosaic_0001>

<llo_original>
// kernel: tpu_custom_call.1
$region0: #{tpu_custom_call.1}
  #allocation0 [shape = 'u32[]', space=smem, size = 0x4, offset = 0x4, fixed_abs, tag = 'smem constant byte address 0x4 - core index']
  #allocation1 [shape = 'u32[72,128]{1,0:T(1,128)}', space=vmem, size = 0x9000, scoped, tag = 'internal scratch']
  #allocation2 [shape = 'f32[1]{0:T(128)S(6)}', space=smem, size = 0x200, scoped, tag = 'scoped memory for tpu_custom_call.1']
  %s0 = inlined_call_operand.vmem [shape: f32[5], index: 0, kind: input, shape index: {}]
  %s1 = inlined_call_operand.vmem [shape: f32[5], index: 1, kind: input, shape index: {}]
  %s2 = inlined_call_operand.vmem [shape: f32[5], index: 2, kind: input, shape index: {}]
  %s3 = inlined_call_operand.<no memory space> [shape: f32[1], index: 3, kind: input, shape index: {}]
  %s4 = inlined_call_operand.hbm [shape: f32[8,128], index: 4, kind: input, shape index: {}]
  %s5 = inlined_call_operand.hbm [shape: f32[8,128], index: 5, kind: output, shape index: {}]
  %s6 = sld [smem:[#allocation0]]
  $region46: #{tpu_custom_call.1} parent=0
    _
  %s8 = ssub.s32 1, %s6
  %s9 = scalar_select 0, %s8, %s6
  %10 = sst [smem:[#allocation2]] %s3
  $region1: #{tpu_custom_call.1} parent=0
    #allocation3 [shape = 'u8[512]{0}', space=smem, size = 0x200, scoped, tag = 'input window, operand 0, single buffered']
    #allocation4 [shape = 's32[1]{0}', space=sflag, size = 0x4, scoped, tag = 'scoped memory for tpu_custom_call.1']
    #allocation5 [shape = 's32[1]{0}', space=sflag, size = 0x4, scoped, tag = 'scoped memory for tpu_custom_call.1']
    #allocation6 [shape = 's32[1]{0}', space=sflag, size = 0x4, scoped, tag = 'scoped memory for tpu_custom_call.1']
    #allocation7 [shape = 'u8[512]{0}', space=smem, size = 0x200, scoped, tag = 'input window, operand 1, single buffered']
    #allocation8 [shape = 's32[1]{0}', space=sflag, size = 0x4, scoped, tag = 'scoped memory for tpu_custom_call.1']
    #allocation9 [shape = 'u8[512]{0}', space=smem, size = 0x200, scoped, tag = 'input window, operand 2, single buffered']
    #allocation10 [shape = 'u8[4096]{0}', space=vmem, size = 0x1000, scoped, tag = 'input window, operand 4, single buffered']
    #allocation11 [shape = 'u8[4096]{0}', space=vmem, size = 0x1000, scoped, tag = 'output window, operand 0, single buffered']
    %11 = vsyncpa [#allocation6], 0
    %12 = vsyncpa [#allocation8], 0
    %13 = vsyncpa [#allocation4], 0
    %14 = vsyncpa [#allocation5], 0
    // Predicated region
    $region2: #{tpu_custom_call.1} parent=1 // pred_check
      _
    $region3: #{tpu_custom_call.1} parent=1 // pred_check_branch
      %16 = sbr.rel (0) target = $region5
    $region4: #{tpu_custom_call.1} parent=1 // pred_region
      %18 = vsyncadd [#allocation6], 0
      %s20 = sshll.u32 %s0, 4
      %s21 = int_to_ptr.vmem [resolvable:$true] %s20
      %23 = dma.vmem_to_smem %s21, 16, [#allocation3], [#allocation6]
    $region5: #{tpu_custom_call.1} parent=1 // pred_fallthru
      _
    // Predicated region
    $region6: #{tpu_custom_call.1} parent=1 // pred_check
      _
    $region7: #{tpu_custom_call.1} parent=1 // pred_check_branch
      %25 = sbr.rel (0) target = $region9
    $region8: #{tpu_custom_call.1} parent=1 // pred_region
      %27 = vsyncadd [#allocation8], 0
      %s29 = sshll.u32 %s1, 4
      %s30 = int_to_ptr.vmem [resolvable:$true] %s29
      %32 = dma.vmem_to_smem %s30, 16, [#allocation7], [#allocation8]
    $region9: #{tpu_custom_call.1} parent=1 // pred_fallthru
      _
    // Predicated region
    $region10: #{tpu_custom_call.1} parent=1 // pred_check
      _
    $region11: #{tpu_custom_call.1} parent=1 // pred_check_branch
      %34 = sbr.rel (0) target = $region13
    $region12: #{tpu_custom_call.1} parent=1 // pred_region
      %36 = vsyncadd [#allocation8], 0
      %s38 = sshll.u32 %s2, 4
      %s39 = int_to_ptr.vmem [resolvable:$true] %s38
      %41 = dma.vmem_to_smem %s39, 16, [#allocation9], [#allocation8]
    $region13: #{tpu_custom_call.1} parent=1 // pred_fallthru
      _
    // Predicated region
    $region14: #{tpu_custom_call.1} parent=1 // pred_check
      _
    $region15: #{tpu_custom_call.1} parent=1 // pred_check_branch
      %43 = sbr.rel (0) target = $region17
    $region16: #{tpu_custom_call.1} parent=1 // pred_region
      _
    $region17: #{tpu_custom_call.1} parent=1 // pred_fallthru
      _
    // Predicated region
    $region18: #{tpu_custom_call.1} parent=1 // pred_check
      _
    $region19: #{tpu_custom_call.1} parent=1 // pred_check_branch
      %45 = sbr.rel (0) target = $region21
    $region20: #{tpu_custom_call.1} parent=1 // pred_region
      %47 = vsyncadd [#allocation4], 0
      %s49 = sshll.u32 %s4, 4
      %s50 = int_to_ptr.hbm [resolvable:$true] %s49
      %s51 = sshll.u32 [#allocation10], 4
      %s52 = int_to_ptr.vmem [resolvable:$true] %s51
      %54 = dma.hbm_to_vmem [thread:$0]  %s50, 128, %s52, [#allocation4]
    $region21: #{tpu_custom_call.1} parent=1 // pred_fallthru
      _
    // Predicated region
    $region22: #{tpu_custom_call.1} parent=1 // pred_check
      _
    $region23: #{tpu_custom_call.1} parent=1 // pred_check_branch
      %56 = sbr.rel (0) target = $region25
    $region24: #{tpu_custom_call.1} parent=1 // pred_region
      %58 = dma.done [#allocation6], 16
    $region25: #{tpu_custom_call.1} parent=1 // pred_fallthru
      _
    // Predicated region
    $region26: #{tpu_custom_call.1} parent=1 // pred_check
      _
    $region27: #{tpu_custom_call.1} parent=1 // pred_check_branch
      %60 = sbr.rel (0) target = $region29
    $region28: #{tpu_custom_call.1} parent=1 // pred_region
      %62 = dma.done [#allocation8], 16
    $region29: #{tpu_custom_call.1} parent=1 // pred_fallthru
      _
    // Predicated region
    $region30: #{tpu_custom_call.1} parent=1 // pred_check
      _
    $region31: #{tpu_custom_call.1} parent=1 // pred_check_branch
      %64 = sbr.rel (0) target = $region33
    $region32: #{tpu_custom_call.1} parent=1 // pred_region
      %66 = dma.done [#allocation8], 16
    $region33: #{tpu_custom_call.1} parent=1 // pred_fallthru
      _
    // Predicated region
    $region34: #{tpu_custom_call.1} parent=1 // pred_check
      _
    $region35: #{tpu_custom_call.1} parent=1 // pred_check_branch
      %68 = sbr.rel (0) target = $region37
    $region36: #{tpu_custom_call.1} parent=1 // pred_region
      %70 = dma.done [#allocation4], 128
    $region37: #{tpu_custom_call.1} parent=1 // pred_fallthru
      _
    %71 = sfence
    %v72 = vld [vmem:[#allocation10] sm:$0xff]
    %s73 = sld [smem:[#allocation3]]
    %v74 = vstv %s73
    %v75 = vmul.f32 %v72, %v74
    %s76 = sld [smem:[#allocation7]]
    %v77 = vstv %s76
    %v78 = vadd.f32 %v75, %v77
    %v79 = vmax.f32 %v78, 0.0
    %s80 = sld [smem:[#allocation9]]
    %v81 = vstv %s80
    %v82 = vmul.f32 %v79, %v81
    %v83 = vadd.f32 %v82, 0.0
    %s84 = sld [smem:[#allocation3 + $0x1]]
    %v85 = vstv %s84
    %v86 = vmul.f32 %v72, %v85
    %s87 = sld [smem:[#allocation7 + $0x1]]
    %v88 = vstv %s87
    %v89 = vadd.f32 %v86, %v88
    %v90 = vmax.f32 %v89, 0.0
    %s91 = sld [smem:[#allocation9 + $0x1]]
    %v92 = vstv %s91
    %v93 = vmul.f32 %v90, %v92
    %v94 = vadd.f32 %v83, %v93
    %s95 = sld [smem:[#allocation3 + $0x2]]
    %v96 = vstv %s95
    %v97 = vmul.f32 %v72, %v96
    %s98 = sld [smem:[#allocation7 + $0x2]]
    %v99 = vstv %s98
    %v100 = vadd.f32 %v97, %v99
    %v101 = vmax.f32 %v100, 0.0
    %s102 = sld [smem:[#allocation9 + $0x2]]
    %v103 = vstv %s102
    %v104 = vmul.f32 %v101, %v103
    %v105 = vadd.f32 %v94, %v104
    %s106 = sld [smem:[#allocation3 + $0x3]]
    %v107 = vstv %s106
    %v108 = vmul.f32 %v72, %v107
    %s109 = sld [smem:[#allocation7 + $0x3]]
    %v110 = vstv %s109
    %v111 = vadd.f32 %v108, %v110
    %v112 = vmax.f32 %v111, 0.0
    %s113 = sld [smem:[#allocation9 + $0x3]]
    %v114 = vstv %s113
    %v115 = vmul.f32 %v112, %v114
    %v116 = vadd.f32 %v105, %v115
    %s117 = sld [smem:[#allocation3 + $0x4]]
    %v118 = vstv %s117
    %v119 = vmul.f32 %v72, %v118
    %s120 = sld [smem:[#allocation7 + $0x4]]
    %v121 = vstv %s120
    %v122 = vadd.f32 %v119, %v121
    %v123 = vmax.f32 %v122, 0.0
    %s124 = sld [smem:[#allocation9 + $0x4]]
    %v125 = vstv %s124
    %v126 = vmul.f32 %v123, %v125
    %v127 = vadd.f32 %v116, %v126
    %s128 = sld [smem:[#allocation2]]
    %v129 = vstv %s128
    %v130 = vadd.f32 %v127, %v129
    %131 = vst [vmem:[#allocation11] sm:$0xff] %v130
    // Predicated region
    $region38: #{tpu_custom_call.1} parent=1 // pred_check
      _
    $region39: #{tpu_custom_call.1} parent=1 // pred_check_branch
      %133 = sbr.rel (0) target = $region41
    $region40: #{tpu_custom_call.1} parent=1 // pred_region
      %135 = vsyncadd [#allocation5], 0
      %s137 = sshll.u32 [#allocation11], 4
      %s138 = int_to_ptr.vmem [resolvable:$true] %s137
      %s139 = sshll.u32 %s5, 4
      %s140 = int_to_ptr.hbm [resolvable:$true] %s139
      %142 = dma.vmem_to_hbm [thread:$0]  %s138, 128, %s140, [#allocation5]
    $region41: #{tpu_custom_call.1} parent=1 // pred_fallthru
      _
    // Predicated region
    $region42: #{tpu_custom_call.1} parent=1 // pred_check
      _
    $region43: #{tpu_custom_call.1} parent=1 // pred_check_branch
      %144 = sbr.rel (0) target = $region45
    $region44: #{tpu_custom_call.1} parent=1 // pred_region
      %146 = dma.done [#allocation5], 128
    $region45: #{tpu_custom_call.1} parent=1 // pred_fallthru
      _
    %147 = vsyncpa [#allocation4], 1
    %148 = vsyncpa [#allocation5], 1
    %149 = vsyncpa [#allocation6], 1
    %150 = vsyncpa [#allocation8], 1

</llo_original>
